<compile_context>
chip_gen: v7x
topology: tpu7x:2x2x1
jax: 0.10.0
libtpu: 0.0.40
codegen_flags: <defaults>
</compile_context>

<pallas_src>
import jax
import jax.numpy as jnp
from jax.experimental import pallas as pl
from jax.experimental.pallas import tpu as pltpu


def _round_up(x: int, m: int) -> int:
    return (x + m - 1) // m * m


def _vmem_capacity_bytes() -> int:
    try:
        return int(pltpu.get_tpu_info().vmem_capacity_bytes)
    except Exception:
        return 64 << 20  # conservative fallback (v7x per-TensorCore VMEM)


def _make_poly_loss_kernel(n_total: int, tile_n: int, tile_pad: int):
    def poly_loss_kernel(logits_ref, target_ref, partial_ref):
        i = pl.program_id(0)

        # In-kernel f32 cast lets callers stream bf16 logits (half the HBM bytes).
        logits = logits_ref[...].astype(jnp.float32)            # (tile_n, C)

        # Lane-dense (1, tile_pad) int32 target row -> (tile_n, 1) column.
        # One XLU relayout per tile; cheap next to the per-vreg lane reductions.
        tgt_col = jnp.transpose(target_ref[...])                 # (tile_pad, 1)
        tgt = tgt_col[:tile_n, :]                                 # (tile_n, 1)

        # Numerically stable log-softmax pieces, per row (class axis = lanes).
        m = jnp.max(logits, axis=-1, keepdims=True)               # (tile_n, 1)
        shifted = logits - m                                       # (tile_n, C)
        lse = jnp.log(jnp.sum(jnp.exp(shifted), axis=-1, keepdims=True))

        # Gather shifted logit at the target class via a lane mask.
        class_ids = jax.lax.broadcasted_iota(jnp.int32, logits.shape, 1)
        tgt_shifted = jnp.sum(
            jnp.where(class_ids == tgt, shifted, 0.0), axis=-1, keepdims=True)

        # Per-row negative log-likelihood: -log_softmax(logits)[target].
        nll = lse - tgt_shifted                                    # (tile_n, 1)

        # Padded rows of a partial last tile read stale VMEM (possibly NaN/Inf);
        # jnp.where SELECTS them away before the reduction (keep it a select).
        row_ids = i * tile_n + jax.lax.broadcasted_iota(jnp.int32, nll.shape, 0)
        nll = jnp.where(row_ids < n_total, nll, 0.0)

        # One lane-dense (1, 128) partial per tile; every lane holds the same
        # f32, so the wrapper combines with sum(partials) / 128 (exact).
        s = jnp.sum(nll, keepdims=True)                            # (1, 1)
        partial_ref[...] = jnp.broadcast_to(s, partial_ref.shape)

    return poly_loss_kernel


def _pick_tile_n(n: int, c: int, vmem_cap: int) -> int:
    if n < 256:
        return n  # tiny problem: single full-array block
    # Per-buffer logits budget, measured in f32 compute footprint so the
    # elementwise intermediates (cast/shift/exp/mask) stay bounded too.
    #   v5e/v6e (128 MiB VMEM) -> ~5.3 MiB per buffer; v7x (64 MiB) -> ~2.7 MiB.
    budget = max(2 << 20, min(6 << 20, vmem_cap // 24))
    tile = max(128, (budget // max(c * 4, 1)) // 128 * 128)
    # Keep num_tiles >= 2 so the "parallel" grid axis can be split across v7x's
    # two TensorCores (neutral on single-TC v5e/v6e).
    tile = min(tile, _round_up(pl.cdiv(n, 2), 128))
    return tile


def poly_loss(output: jax.Array, target: jax.Array, num_classes: int,
              epsilon: float = 1.0, tile_n: int | None = None):
    """PolyLoss forward.

    output: (N, C) float logits — f32 or bf16 (bf16 streams half the HBM bytes;
            the kernel casts to f32 internally).
    target: (N,) int labels in [0, num_classes).
    """
    assert output.ndim == 2 and output.shape[1] == num_classes
    n, c = output.shape
    itemsize = output.dtype.itemsize
    vmem_cap = _vmem_capacity_bytes()

    # Dtype-aware sublane alignment: 8 rows f32, 16 bf16, 32 int8/fp8.
    align = 8 * max(1, 4 // max(itemsize, 1))

    if tile_n is None:
        tile_n = _pick_tile_n(n, c, vmem_cap)
    else:
        tile_n = min(int(tile_n), n)
        if tile_n != n:
            assert tile_n % align == 0, (
                f"tile_n must be a multiple of {align} for dtype {output.dtype} (or >= N)")
    num_tiles = pl.cdiv(n, tile_n)
    tile_pad = _round_up(tile_n, 128)  # lane-dense target row width per tile

    # Lane-dense targets: (1, num_tiles * tile_pad) int32; tile i occupies lanes
    # [i*tile_pad, i*tile_pad + tile_n).  One contiguous HBM->VMEM copy per step.
    tgt = target.astype(jnp.int32).reshape(n)
    tgt = jnp.pad(tgt, (0, num_tiles * tile_n - n))
    tgt = tgt.reshape(num_tiles, tile_n)
    if tile_pad != tile_n:
        tgt = jnp.pad(tgt, ((0, 0), (0, tile_pad - tile_n)))
    tgt = tgt.reshape(1, num_tiles * tile_pad)

    # Explicit VMEM limit: double-buffered logits tile + lane-dense target rows
    # + elementwise f32 intermediates (+ the transposed target column) + slack.
    tile_in_bytes = tile_n * c * itemsize
    tile_f32_bytes = tile_n * c * 4
    est = (2 * tile_in_bytes + 8 * tile_f32_bytes
           + 2 * 8 * tile_pad * 4 + tile_pad * 512 + (1 << 20))
    vmem_limit = int(min(max(est, 32 << 20), 0.85 * vmem_cap))

    cost = pl.CostEstimate(
        flops=5 * n * c,
        transcendentals=n * c + n,
        bytes_accessed=n * c * itemsize + num_tiles * tile_pad * 4 + num_tiles * 128 * 4,
    )

    # TODO(synk): F.cross_entropy raises on out-of-range targets; here an
    # out-of-range label silently contributes nll = lse (no gather hit).
    # TODO(synk): if num_classes is small (e.g. SiamBAN's cls head, C~2), repack
    # several rows' classes into the 128-lane axis in the wrapper to avoid
    # mostly-dead lanes; not needed for C >= 128.
    partials = pl.pallas_call(
        _make_poly_loss_kernel(n, tile_n, tile_pad),
        out_shape=jax.ShapeDtypeStruct((1, num_tiles * 128), jnp.float32),
        grid_spec=pltpu.PrefetchScalarGridSpec(
            num_scalar_prefetch=0,
            grid=(num_tiles,),
            in_specs=[
                pl.BlockSpec((tile_n, c), lambda i: (i, 0)),
                pl.BlockSpec((1, tile_pad), lambda i: (0, i)),
            ],
            out_specs=pl.BlockSpec((1, 128), lambda i: (0, i)),
        ),
        compiler_params=pltpu.CompilerParams(
            # Independent per-tile partials: lets v7x shard tiles across its
            # two TensorCores (neutral on single-TC v5e/v6e).
            dimension_semantics=("parallel",),
            vmem_limit_bytes=vmem_limit,
        ),
        cost_estimate=cost,
    )(output, tgt)

    # All 128 lanes of each tile's partial hold the same f32 -> exact /128.
    nll_sum = jnp.sum(partials) * (1.0 / 128.0)
    ce = nll_sum / n
    # mean_i(ce + eps*(1 - logp_t_i)) == (1 + eps) * ce + eps   (mean logp_t = -ce)
    return (1.0 + epsilon) * ce + epsilon


def poly_loss_ref(output, target, num_classes, epsilon=1.0):
    """Pure-JAX reference mirroring the PyTorch module literally."""
    log_sm = jax.nn.log_softmax(output.astype(jnp.float32), axis=-1)
    nll = -jnp.take_along_axis(log_sm, target[:, None].astype(jnp.int32), axis=-1)[:, 0]
    ce = jnp.mean(nll)
    pt = jnp.sum(jax.nn.one_hot(target, num_classes) * log_sm, axis=-1)
    return jnp.mean(ce + epsilon * (1.0 - pt))


if __name__ == "__main__":
    # Small shapes: batch N=200 (not a multiple of the tile -> exercises the
    # partial-last-tile masking and target padding), C=128, epsilon=1.0.
    N, C = 200, 128
    epsilon = 1.0

    key = jax.random.PRNGKey(0)
    k_logits, k_target = jax.random.split(key)
    output = jax.random.normal(k_logits, (N, C), dtype=jnp.float32)
    target = jax.random.randint(k_target, (N,), 0, C, dtype=jnp.int32)

    # 1) Tiled path (multiple grid steps + partial last tile + lane-padded targets).
    loss_tiled = jax.block_until_ready(
        poly_loss(output, target, num_classes=C, epsilon=epsilon, tile_n=64))
    ref = poly_loss_ref(output, target, num_classes=C, epsilon=epsilon)
    assert jnp.allclose(loss_tiled, ref, atol=1e-5, rtol=1e-5), (loss_tiled, ref)

    # 2) Auto tile-size path (single full block for this small N).
    loss_auto = jax.block_until_ready(
        poly_loss(output, target, num_classes=C, epsilon=epsilon))
    assert jnp.allclose(loss_auto, ref, atol=1e-5, rtol=1e-5), (loss_auto, ref)

    # 3) bf16 logits streamed directly (kernel casts to f32 internally).
    out_bf16 = output.astype(jnp.bfloat16)
    loss_bf16 = jax.block_until_ready(
        poly_loss(out_bf16, target, num_classes=C, epsilon=epsilon, tile_n=64))
    ref_bf16 = poly_loss_ref(out_bf16, target, num_classes=C, epsilon=epsilon)
    assert jnp.allclose(loss_bf16, ref_bf16, atol=1e-5, rtol=1e-5), (loss_bf16, ref_bf16)

    print("KERNEL_OK")
</pallas_src>

<mosaic_0001>
module attributes {stable_mosaic.version = 11 : i64} {
  func.func @poly_loss_kernel(%arg0: i32, %arg1: memref<64x128xf32, #tpu.memory_space<vmem>>, %arg2: memref<1x128xi32, #tpu.memory_space<vmem>>, %arg3: memref<1x128xf32, #tpu.memory_space<vmem>>) attributes {dimension_semantics = [#tpu.dimension_semantics<parallel>], iteration_bounds = array<i64: 4>, scalar_prefetch = 0 : i64, scratch_operands = 0 : i64, tpu.core_type = #tpu.core_type<tc>, window_params = [{transform_indices = @transform_0, window_bounds = array<i64: 64, 128>}, {transform_indices = @transform_1, window_bounds = array<i64: 1, 128>}, {transform_indices = @transform_2, window_bounds = array<i64: 1, 128>}]} {
    %c0 = arith.constant 0 : index
    %c0_0 = arith.constant 0 : index
    %0 = vector.load %arg1[%c0, %c0_0] : memref<64x128xf32, #tpu.memory_space<vmem>>, vector<64x128xf32>
    %c0_1 = arith.constant 0 : index
    %c0_2 = arith.constant 0 : index
    %1 = vector.load %arg2[%c0_1, %c0_2] : memref<1x128xi32, #tpu.memory_space<vmem>>, vector<1x128xi32>
    %2 = tpu.transpose %1, [1, 0] : vector<1x128xi32> -> vector<128x1xi32>
    %3 = vector.extract_strided_slice %2 {offsets = [0, 0], sizes = [64, 1], strides = [1, 1]} : vector<128x1xi32> to vector<64x1xi32>
    %cst = arith.constant dense<0xFF800000> : vector<64xf32>
    %4 = vector.multi_reduction <maximumf>, %0, %cst [1] : vector<64x128xf32> to vector<64xf32>
    %5 = vector.shape_cast %4 : vector<64xf32> to vector<64x1xf32>
    %6 = vector.broadcast %5 : vector<64x1xf32> to vector<64x128xf32>
    %7 = arith.subf %0, %6 : vector<64x128xf32>
    %8 = math.exp %7 : vector<64x128xf32>
    %cst_3 = arith.constant dense<0.000000e+00> : vector<64xf32>
    %9 = vector.multi_reduction <add>, %8, %cst_3 [1] : vector<64x128xf32> to vector<64xf32>
    %10 = vector.shape_cast %9 : vector<64xf32> to vector<64x1xf32>
    %11 = math.log %10 : vector<64x1xf32>
    %12 = tpu.iota {dimensions = array<i32: 1>} : vector<64x128xi32>
    %13 = vector.broadcast %3 : vector<64x1xi32> to vector<64x128xi32>
    %14 = arith.cmpi eq, %12, %13 : vector<64x128xi32>
    %cst_4 = arith.constant 0.000000e+00 : f32
    %15 = vector.broadcast %cst_4 : f32 to vector<64x128xf32>
    %16 = arith.select %14, %7, %15 : vector<64x128xi1>, vector<64x128xf32>
    %cst_5 = arith.constant dense<0.000000e+00> : vector<64xf32>
    %17 = vector.multi_reduction <add>, %16, %cst_5 [1] : vector<64x128xf32> to vector<64xf32>
    %18 = vector.shape_cast %17 : vector<64xf32> to vector<64x1xf32>
    %19 = arith.subf %11, %18 : vector<64x1xf32>
    %c64_i32 = arith.constant 64 : i32
    %20 = arith.muli %arg0, %c64_i32 : i32
    %21 = tpu.iota {dimensions = array<i32: 0>} : vector<64x1xi32>
    %22 = vector.broadcast %20 : i32 to vector<64x1xi32>
    %23 = arith.addi %22, %21 : vector<64x1xi32>
    %c200_i32 = arith.constant 200 : i32
    %24 = vector.broadcast %c200_i32 : i32 to vector<64x1xi32>
    %25 = arith.cmpi slt, %23, %24 : vector<64x1xi32>
    %cst_6 = arith.constant 0.000000e+00 : f32
    %26 = vector.broadcast %cst_6 : f32 to vector<64x1xf32>
    %27 = arith.select %25, %19, %26 : vector<64x1xi1>, vector<64x1xf32>
    %28 = vector.shape_cast %27 : vector<64x1xf32> to vector<1x64x1xf32>
    %cst_7 = arith.constant dense<0.000000e+00> : vector<1xf32>
    %29 = vector.multi_reduction <add>, %28, %cst_7 [1, 2] : vector<1x64x1xf32> to vector<1xf32>
    %30 = vector.shape_cast %29 : vector<1xf32> to vector<1x1x1xf32>
    %31 = vector.extract %30[0, 0, 0] : f32 from vector<1x1x1xf32>
    %32 = vector.broadcast %31 : f32 to vector<1x1xf32>
    %33 = vector.shape_cast %32 : vector<1x1xf32> to vector<1x1xf32>
    %34 = vector.broadcast %33 : vector<1x1xf32> to vector<1x128xf32>
    %c0_8 = arith.constant 0 : index
    %c0_9 = arith.constant 0 : index
    %35 = vector.load %arg3[%c0_8, %c0_9] : memref<1x128xf32, #tpu.memory_space<vmem>>, vector<1x128xf32>
    tpu.vector_store %arg3[%c0_8, %c0_9], %34 {strides = array<i32>} : memref<1x128xf32, #tpu.memory_space<vmem>>, vector<1x128xf32>,
    return
  }
  func.func @transform_0(%arg0: i32) -> (i32, i32) {
    %c0_i32 = arith.constant 0 : i32
    %c0_i32_0 = arith.constant 0 : i32
    return %arg0, %c0_i32 : i32, i32
  }
  func.func @transform_1(%arg0: i32) -> (i32, i32) {
    %c0_i32 = arith.constant 0 : i32
    %c0_i32_0 = arith.constant 0 : i32
    return %c0_i32, %arg0 : i32, i32
  }
  func.func @transform_2(%arg0: i32) -> (i32, i32) {
    %c0_i32 = arith.constant 0 : i32
    %c0_i32_0 = arith.constant 0 : i32
    return %c0_i32, %arg0 : i32, i32
  }
}

</mosaic_0001>

<llo_original>
// kernel: tpu_custom_call.1
$region0: #{tpu_custom_call.1}
  #allocation0 [shape = 'u32[]', space=smem, size = 0x4, offset = 0x4, fixed_abs, tag = 'smem constant byte address 0x4 - core index']
  #allocation1 [shape = 'u32[144,128]{1,0:T(1,128)}', space=vmem, size = 0x12000, scoped, tag = 'internal scratch']
  %s0 = inlined_call_operand.hbm [shape: f32[200,128], index: 0, kind: input, shape index: {}]
  %s1 = inlined_call_operand.hbm [shape: s32[1,512], index: 1, kind: input, shape index: {}]
  %s2 = inlined_call_operand.hbm [shape: f32[1,512], index: 2, kind: output, shape index: {}]
  %s3 = sld [smem:[#allocation0]]
  $region49: #{tpu_custom_call.1} parent=0
    _
  %s5 = ssub.s32 1, %s3
  %s6 = scalar_select 0, %s5, %s3
  $region1: #{tpu_custom_call.1} parent=0
    #allocation2 [shape = 'u8[65536]{0}', space=vmem, size = 0x10000, scoped, tag = 'input window, operand 0']
    #allocation3 [shape = 's32[2]{0}', space=sflag, size = 0x8, scoped, tag = 'scoped memory for tpu_custom_call.1']
    #allocation4 [shape = 's32[2]{0}', space=sflag, size = 0x8, scoped, tag = 'scoped memory for tpu_custom_call.1']
    #allocation5 [shape = 'u8[1024]{0}', space=vmem, size = 0x400, scoped, tag = 'input window, operand 1']
    #allocation6 [shape = 's32[2]{0}', space=sflag, size = 0x8, scoped, tag = 'scoped memory for tpu_custom_call.1']
    #allocation7 [shape = 'u8[1024]{0}', space=vmem, size = 0x400, scoped, tag = 'output window, operand 0']
    %7 = vsyncpa [#allocation3], 0
    %s8 = scalar_lea.sflag [#allocation3], 1
    %9 = vsyncpa %s8, 0
    %10 = vsyncpa [#allocation6], 0
    %s11 = scalar_lea.sflag [#allocation6], 1
    %12 = vsyncpa %s11, 0
    %13 = vsyncpa [#allocation4], 0
    %s14 = scalar_lea.sflag [#allocation4], 1
    %15 = vsyncpa %s14, 0
    loop: start=0, step=1, limit=6
    $region2: #{tpu_custom_call.1} parent=1 // loop_pre_header
      _
    $region3: #{tpu_custom_call.1} parent=1 // loop_header
      %s17 = sphi 0, %s21
      %p18 = scmp.ge.s32.totalorder %s17, 6
      %s27 = sphi 0, %s29
      %s30 = sphi 0, %s27
      %s31 = sphi 0, %s30
      %s47 = sphi 0, %s31
      %s53 = sphi 0, %s55
      %s56 = sphi 0, %s53
      %s57 = sphi 0, %s56
      %s73 = sphi 0, %s57
      %s79 = sphi 0, %s81
      %s82 = sphi 0, %s79
      %s83 = sphi 0, %s82
      %s99 = sphi 0, %s83
    $region4: #{tpu_custom_call.1} parent=1 // loop_header_branch
      %20 = sbr.rel (%p18) target = $region8
    $region5: #{tpu_custom_call.1} parent=1 // loop_body
      %s22 = ssub.s32 %s17, 1
      %s23 = ssub.s32 %s17, 2
      %s24 = sadd.s32 %s17, 1
      %s25 = ssub.s32 %s17, %s24
      %p26 = scmp.eq.s32.totalorder %s25, 0
      %s28 = sadd.s32 %s27, 1
      %s29 = scalar_select %p26, %s27, %s28
      %p32 = pneg %p26
      %p33 = scmp.eq.s32.totalorder %s17, 3
      %p34 = por %p32, %p33
      %p35 = scmp.ne.s32.totalorder %s27, %s30
      %p36 = scmp.eq.s32.totalorder %s17, 0
      %p37 = por %p35, %p36
      %p38 = scmp.ne.s32.totalorder %s27, %s30
      %p39 = scmp.eq.s32.totalorder %s22, 3
      %p40 = por %p38, %p39
      %p41 = scmp.ne.s32.totalorder %s30, %s31
      %p42 = scmp.eq.s32.totalorder %s22, 0
      %p43 = por %p41, %p42
      %p44 = scmp.ne.s32.totalorder %s30, %s31
      %p45 = scmp.eq.s32.totalorder %s23, 3
      %p46 = por %p44, %p45
      %p48 = scmp.ne.s32.totalorder %s31, %s47
      %p49 = scmp.eq.s32.totalorder %s23, 0
      %p50 = por %p48, %p49
      %s51 = ssub.s32 %s17, %s24
      %p52 = scmp.eq.s32.totalorder %s51, 0
      %s54 = sadd.s32 %s53, 1
      %s55 = scalar_select %p52, %s53, %s54
      %p58 = pneg %p52
      %p59 = scmp.eq.s32.totalorder %s17, 3
      %p60 = por %p58, %p59
      %p61 = scmp.ne.s32.totalorder %s53, %s56
      %p62 = scmp.eq.s32.totalorder %s17, 0
      %p63 = por %p61, %p62
      %p64 = scmp.ne.s32.totalorder %s53, %s56
      %p65 = scmp.eq.s32.totalorder %s22, 3
      %p66 = por %p64, %p65
      %p67 = scmp.ne.s32.totalorder %s56, %s57
      %p68 = scmp.eq.s32.totalorder %s22, 0
      %p69 = por %p67, %p68
      %p70 = scmp.ne.s32.totalorder %s56, %s57
      %p71 = scmp.eq.s32.totalorder %s23, 3
      %p72 = por %p70, %p71
      %p74 = scmp.ne.s32.totalorder %s57, %s73
      %p75 = scmp.eq.s32.totalorder %s23, 0
      %p76 = por %p74, %p75
      %s77 = ssub.s32 %s17, %s24
      %p78 = scmp.eq.s32.totalorder %s77, 0
      %s80 = sadd.s32 %s79, 1
      %s81 = scalar_select %p78, %s79, %s80
      %p84 = pneg %p78
      %p85 = scmp.eq.s32.totalorder %s17, 3
      %p86 = por %p84, %p85
      %p87 = scmp.ne.s32.totalorder %s79, %s82
      %p88 = scmp.eq.s32.totalorder %s17, 0
      %p89 = por %p87, %p88
      %p90 = scmp.ne.s32.totalorder %s79, %s82
      %p91 = scmp.eq.s32.totalorder %s22, 3
      %p92 = por %p90, %p91
      %p93 = scmp.ne.s32.totalorder %s82, %s83
      %p94 = scmp.eq.s32.totalorder %s22, 0
      %p95 = por %p93, %p94
      %p96 = scmp.ne.s32.totalorder %s82, %s83
      %p97 = scmp.eq.s32.totalorder %s23, 3
      %p98 = por %p96, %p97
      %p100 = scmp.ne.s32.totalorder %s83, %s99
      %p101 = scmp.eq.s32.totalorder %s23, 0
      %p102 = por %p100, %p101
      %p103 = scmp.le.s32.totalorder 1, %s17
      %p104 = scmp.lt.s32.totalorder %s17, 5
      %p105 = pnand %p103, %p104
      %p106 = pneg %p105
      // Predicated region
      $region9: #{tpu_custom_call.1} parent=5 // pred_check
        _
      $region10: #{tpu_custom_call.1} parent=5 // pred_check_branch
        %108 = sbr.rel (%p105) target = $region12
      $region11: #{tpu_custom_call.1} parent=5 // pred_region
        %s109 = ssub.s32 %s17, 1
      $region12: #{tpu_custom_call.1} parent=5 // pred_fallthru
        _
      %p110 = scmp.lt.s32.totalorder %s17, 4
      // Predicated region
      $region13: #{tpu_custom_call.1} parent=5 // pred_check
        %p111 = pneg %p110
      $region14: #{tpu_custom_call.1} parent=5 // pred_check_branch
        %113 = sbr.rel (%p111) target = $region16
      $region15: #{tpu_custom_call.1} parent=5 // pred_region
        // Predicated region
        $region17: #{tpu_custom_call.1} parent=15 // pred_check
          %p114 = pneg %p37
        $region18: #{tpu_custom_call.1} parent=15 // pred_check_branch
          %116 = sbr.rel (%p114) target = $region20
        $region19: #{tpu_custom_call.1} parent=15 // pred_region
          %s117 = sand.u32 %s27, 1
          %s118 = scalar_lea.sflag [#allocation3], %s117
          %s119 = sand.u32 %s27, 1
          %s120 = smul.addr %s119, 64
          %s121 = scalar_lea.vmem [#allocation2], %s120
          %s122 = smul.u32 8, %s17
          %s123 = ssub.s32 25, %s122
          %p124 = scmp.lt.s32.totalorder %s123, 8
          %s125 = scalar_select %p124, %s123, 8
          %s126 = smul.u32 128, %s125
          %s128 = ssub.s32 1024, %s126
          %129 = vsyncadd %s118, %s128
          %p130 = scmp.ne.s32.totalorder 0, %s126
          %s131 = smul.addr %s122, 128
          %s132 = scalar_lea.hbm %s0, %s131
          %s133 = smul.u32 8, %s125
          %s134 = sshll.u32 %s121, 4
          %s135 = int_to_ptr.vmem [resolvable:$true] %s134
          %s136 = sshll.u32 %s133, 4
          %140 = dma.hbm_to_vmem [thread:$0]  (%p130), %s132, %s136, %s135, %s118, 128, 128, 8
        $region20: #{tpu_custom_call.1} parent=15 // pred_fallthru
          _
        // Predicated region
        $region21: #{tpu_custom_call.1} parent=15 // pred_check
          %p141 = pneg %p63
        $region22: #{tpu_custom_call.1} parent=15 // pred_check_branch
          %143 = sbr.rel (%p141) target = $region24
        $region23: #{tpu_custom_call.1} parent=15 // pred_region
          %s144 = sand.u32 %s53, 1
          %s145 = scalar_lea.sflag [#allocation6], %s144
          %s146 = sand.u32 %s53, 1
          %s147 = scalar_lea.vmem [#allocation5], %s146
          %s149 = ssub.s32 16, 16
          %150 = vsyncadd %s145, %s149
          %s151 = smul.addr %s17, 16
          %s152 = scalar_lea.hbm %s1, %s151
          %s154 = sshll.u32 %s147, 4
          %s155 = int_to_ptr.vmem [resolvable:$true] %s154
          %157 = dma.hbm_to_vmem [thread:$0]  %s152, 16, %s155, %s145
        $region24: #{tpu_custom_call.1} parent=15 // pred_fallthru
          _
      $region16: #{tpu_custom_call.1} parent=5 // pred_fallthru
        _
      %p158 = scmp.le.s32.totalorder 1, %s17
      %p159 = scmp.lt.s32.totalorder %s17, 5
      %p160 = pnand %p158, %p159
      %p161 = pneg %p160
      // Predicated region
      $region25: #{tpu_custom_call.1} parent=5 // pred_check
        _
      $region26: #{tpu_custom_call.1} parent=5 // pred_check_branch
        %163 = sbr.rel (%p160) target = $region28
      $region27: #{tpu_custom_call.1} parent=5 // pred_region
        %s164 = ssub.s32 %s17, 1
        %s165 = sand.u32 %s30, 1
        %s166 = scalar_lea.sflag [#allocation3], %s165
        %s167 = sand.u32 %s30, 1
        %s168 = smul.addr %s167, 64
        %s169 = scalar_lea.vmem [#allocation2], %s168
        // Predicated region
        $region29: #{tpu_custom_call.1} parent=27 // pred_check
          %p170 = pneg %p43
        $region30: #{tpu_custom_call.1} parent=27 // pred_check_branch
          %172 = sbr.rel (%p170) target = $region32
        $region31: #{tpu_custom_call.1} parent=27 // pred_region
          %173 = dma.done %s166, 1024
        $region32: #{tpu_custom_call.1} parent=27 // pred_fallthru
          _
        %s174 = sand.u32 %s56, 1
        %s175 = scalar_lea.sflag [#allocation6], %s174
        %s176 = sand.u32 %s56, 1
        %s177 = scalar_lea.vmem [#allocation5], %s176
        // Predicated region
        $region33: #{tpu_custom_call.1} parent=27 // pred_check
          %p178 = pneg %p69
        $region34: #{tpu_custom_call.1} parent=27 // pred_check_branch
          %180 = sbr.rel (%p178) target = $region36
        $region35: #{tpu_custom_call.1} parent=27 // pred_region
          %181 = dma.done %s175, 16
        $region36: #{tpu_custom_call.1} parent=27 // pred_fallthru
          _
        %s182 = sand.u32 %s30, 1
        %s183 = scalar_lea.sflag [#allocation3], %s182
        %s184 = sand.u32 %s30, 1
        %s185 = smul.addr %s184, 64
        %s186 = scalar_lea.vmem [#allocation2], %s185
        %p187 = pneg %p43
        %p188 = pneg %p40
        %s189 = sand.u32 %s56, 1
        %s190 = scalar_lea.sflag [#allocation6], %s189
        %s191 = sand.u32 %s56, 1
        %s192 = scalar_lea.vmem [#allocation5], %s191
        %p193 = pneg %p69
        %p194 = pneg %p66
        %p195 = pneg %p95
        %p196 = pneg %p92
        %s197 = sand.u32 %s82, 1
        %s198 = scalar_lea.sflag [#allocation4], %s197
        %s199 = sand.u32 %s82, 1
        %s200 = scalar_lea.vmem [#allocation7], %s199
        %s201 = smul.u32 8, %s22
        %s202 = ssub.s32 25, %s201
        %p203 = scmp.lt.s32.totalorder %s202, 8
        %s204 = scalar_select %p203, %s202, 8
        %s205 = smul.u32 128, %s204
        %v206 = vld [vmem:[%s169] sm:$0xff]
        %v207 = vld [vmem:[%s169 + $0x8] sm:$0xff]
        %v208 = vld [vmem:[%s169 + $0x10] sm:$0xff]
        %v209 = vld [vmem:[%s169 + $0x18] sm:$0xff]
        %v210 = vld [vmem:[%s169 + $0x20] sm:$0xff]
        %v211 = vld [vmem:[%s169 + $0x28] sm:$0xff]
        %v212 = vld [vmem:[%s169 + $0x30] sm:$0xff]
        %v213 = vld [vmem:[%s169 + $0x38] sm:$0xff]
        %v214 = vld [vmem:[%s177] sm:$0x1]
        %215 = vxpose.xlu0.b32.start [1/16] %v214, 128
        %216 = vxpose.xlu0.b32.cont [2/16] 0, 128
        %217 = vxpose.xlu0.b32.cont [3/16] 0, 128
        %218 = vxpose.xlu0.b32.cont [4/16] 0, 128
        %219 = vxpose.xlu0.b32.cont [5/16] 0, 128
        %220 = vxpose.xlu0.b32.cont [6/16] 0, 128
        %221 = vxpose.xlu0.b32.cont [7/16] 0, 128
        %222 = vxpose.xlu0.b32.cont [8/16] 0, 128
        %223 = vxpose.xlu0.b32.cont [9/16] 0, 128
        %224 = vxpose.xlu0.b32.cont [10/16] 0, 128
        %225 = vxpose.xlu0.b32.cont [11/16] 0, 128
        %226 = vxpose.xlu0.b32.cont [12/16] 0, 128
        %227 = vxpose.xlu0.b32.cont [13/16] 0, 128
        %228 = vxpose.xlu0.b32.cont [14/16] 0, 128
        %229 = vxpose.xlu0.b32.cont [15/16] 0, 128
        %230 = vxpose.xlu0.b32.end [16/16] 0, 128
        %v231 = vpop.trf.xlu0
        %v232 = vpop.trf.xlu0
        %v233 = vpop.trf.xlu0
        %v234 = vpop.trf.xlu0
        %v235 = vpop.trf.xlu0
        %v236 = vpop.trf.xlu0
        %v237 = vpop.trf.xlu0
        %v238 = vpop.trf.xlu0
        %v239 = vpop.trf.xlu0
        %v240 = vpop.trf.xlu0
        %v241 = vpop.trf.xlu0
        %v242 = vpop.trf.xlu0
        %v243 = vpop.trf.xlu0
        %v244 = vpop.trf.xlu0
        %v245 = vpop.trf.xlu0
        %v246 = vpop.trf.xlu0
        %247 = vmax.xlane.f32.xlu0 %v206
        %v248 = vpop.xlane.xlu0 %247
        %249 = vmax.xlane.f32.xlu0 %v207
        %v250 = vpop.xlane.xlu0 %249
        %251 = vmax.xlane.f32.xlu0 %v208
        %v252 = vpop.xlane.xlu0 %251
        %253 = vmax.xlane.f32.xlu0 %v209
        %v254 = vpop.xlane.xlu0 %253
        %255 = vmax.xlane.f32.xlu0 %v210
        %v256 = vpop.xlane.xlu0 %255
        %257 = vmax.xlane.f32.xlu0 %v211
        %v258 = vpop.xlane.xlu0 %257
        %259 = vmax.xlane.f32.xlu0 %v212
        %v260 = vpop.xlane.xlu0 %259
        %261 = vmax.xlane.f32.xlu0 %v213
        %v262 = vpop.xlane.xlu0 %261
        %v263 = vsub.f32 %v206, %v248
        %v264 = vsub.f32 %v207, %v250
        %v265 = vsub.f32 %v208, %v252
        %v266 = vsub.f32 %v209, %v254
        %v267 = vsub.f32 %v210, %v256
        %v268 = vsub.f32 %v211, %v258
        %v269 = vsub.f32 %v212, %v260
        %v270 = vsub.f32 %v213, %v262
        %v271 = vmul.f32 %v263, 1.442695
        %v272 = vpow.pop %v271
        %v273 = vmul.f32 %v264, 1.442695
        %v274 = vpow.pop %v273
        %v275 = vmul.f32 %v265, 1.442695
        %v276 = vpow.pop %v275
        %v277 = vmul.f32 %v266, 1.442695
        %v278 = vpow.pop %v277
        %v279 = vmul.f32 %v267, 1.442695
        %v280 = vpow.pop %v279
        %v281 = vmul.f32 %v268, 1.442695
        %v282 = vpow.pop %v281
        %v283 = vmul.f32 %v269, 1.442695
        %v284 = vpow.pop %v283
        %v285 = vmul.f32 %v270, 1.442695
        %v286 = vpow.pop %v285
        %287 = vadd.xlane.f32.xlu0 %v272
        %v288 = vpop.xlane.xlu0 %287
        %289 = vadd.xlane.f32.xlu0 %v274
        %v290 = vpop.xlane.xlu0 %289
        %291 = vadd.xlane.f32.xlu0 %v276
        %v292 = vpop.xlane.xlu0 %291
        %293 = vadd.xlane.f32.xlu0 %v278
        %v294 = vpop.xlane.xlu0 %293
        %295 = vadd.xlane.f32.xlu0 %v280
        %v296 = vpop.xlane.xlu0 %295
        %297 = vadd.xlane.f32.xlu0 %v282
        %v298 = vpop.xlane.xlu0 %297
        %299 = vadd.xlane.f32.xlu0 %v284
        %v300 = vpop.xlane.xlu0 %299
        %301 = vadd.xlane.f32.xlu0 %v286
        %v302 = vpop.xlane.xlu0 %301
        %v303 = vlog2.pop %v288
        %v304 = vmul.f32 %v303, 0.6931472
        %v305 = vlog2.pop %v290
        %v306 = vmul.f32 %v305, 0.6931472
        %v307 = vlog2.pop %v292
        %v308 = vmul.f32 %v307, 0.6931472
        %v309 = vlog2.pop %v294
        %v310 = vmul.f32 %v309, 0.6931472
        %v311 = vlog2.pop %v296
        %v312 = vmul.f32 %v311, 0.6931472
        %v313 = vlog2.pop %v298
        %v314 = vmul.f32 %v313, 0.6931472
        %v315 = vlog2.pop %v300
        %v316 = vmul.f32 %v315, 0.6931472
        %v317 = vlog2.pop %v302
        %v318 = vmul.f32 %v317, 0.6931472
        %v319 = vlaneseq
        %v320 = vand.u32 %v319, 127
        %321 = vset.pattern.permute.xlu0 0
        %322 = vperm.xlu0 %321, %v231
        %v323 = vpop.permute.xlu0 %322
        %324 = vset.pattern.permute.xlu0 0
        %325 = vperm.xlu0 %324, %v232
        %v326 = vpop.permute.xlu0 %325
        %327 = vset.pattern.permute.xlu0 0
        %328 = vperm.xlu0 %327, %v233
        %v329 = vpop.permute.xlu0 %328
        %330 = vset.pattern.permute.xlu0 0
        %331 = vperm.xlu0 %330, %v234
        %v332 = vpop.permute.xlu0 %331
        %333 = vset.pattern.permute.xlu0 0
        %334 = vperm.xlu0 %333, %v235
        %v335 = vpop.permute.xlu0 %334
        %336 = vset.pattern.permute.xlu0 0
        %337 = vperm.xlu0 %336, %v236
        %v338 = vpop.permute.xlu0 %337
        %339 = vset.pattern.permute.xlu0 0
        %340 = vperm.xlu0 %339, %v237
        %v341 = vpop.permute.xlu0 %340
        %342 = vset.pattern.permute.xlu0 0
        %343 = vperm.xlu0 %342, %v238
        %v344 = vpop.permute.xlu0 %343
        %vm345 = vcmp.eq.s32.totalorder %v320, %v323
        %vm346 = vcmp.eq.s32.totalorder %v320, %v326
        %vm347 = vcmp.eq.s32.totalorder %v320, %v329
        %vm348 = vcmp.eq.s32.totalorder %v320, %v332
        %vm349 = vcmp.eq.s32.totalorder %v320, %v335
        %vm350 = vcmp.eq.s32.totalorder %v320, %v338
        %vm351 = vcmp.eq.s32.totalorder %v320, %v341
        %vm352 = vcmp.eq.s32.totalorder %v320, %v344
        %v353 = vsel %vm345, %v263, 0.0
        %v354 = vsel %vm346, %v264, 0.0
        %v355 = vsel %vm347, %v265, 0.0
        %v356 = vsel %vm348, %v266, 0.0
        %v357 = vsel %vm349, %v267, 0.0
        %v358 = vsel %vm350, %v268, 0.0
        %v359 = vsel %vm351, %v269, 0.0
        %v360 = vsel %vm352, %v270, 0.0
        %361 = vadd.xlane.f32.xlu0 %v353
        %v362 = vpop.xlane.xlu0 %361
        %363 = vadd.xlane.f32.xlu0 %v354
        %v364 = vpop.xlane.xlu0 %363
        %365 = vadd.xlane.f32.xlu0 %v355
        %v366 = vpop.xlane.xlu0 %365
        %367 = vadd.xlane.f32.xlu0 %v356
        %v368 = vpop.xlane.xlu0 %367
        %369 = vadd.xlane.f32.xlu0 %v357
        %v370 = vpop.xlane.xlu0 %369
        %371 = vadd.xlane.f32.xlu0 %v358
        %v372 = vpop.xlane.xlu0 %371
        %373 = vadd.xlane.f32.xlu0 %v359
        %v374 = vpop.xlane.xlu0 %373
        %375 = vadd.xlane.f32.xlu0 %v360
        %v376 = vpop.xlane.xlu0 %375
        %v377 = vsub.f32 %v304, %v362
        %v378 = vsub.f32 %v306, %v364
        %v379 = vsub.f32 %v308, %v366
        %v380 = vsub.f32 %v310, %v368
        %v381 = vsub.f32 %v312, %v370
        %v382 = vsub.f32 %v314, %v372
        %v383 = vsub.f32 %v316, %v374
        %v384 = vsub.f32 %v318, %v376
        %s385 = smul.u32 %s22, 64
        %v386 = vlaneseq
        %v387 = vshrl.u32 %v386, 7
        %v388 = vadd.s32 %v387, 8
        %v389 = vadd.s32 %v387, 16
        %v390 = vadd.s32 %v387, 24
        %v391 = vadd.s32 %v387, 32
        %v392 = vadd.s32 %v387, 40
        %v393 = vadd.s32 %v387, 48
        %v394 = vadd.s32 %v387, 56
        %v395 = vstv %s385
        %v396 = vadd.s32 %v395, %v387
        %v397 = vadd.s32 %v395, %v388
        %v398 = vadd.s32 %v395, %v389
        %v399 = vadd.s32 %v395, %v390
        %v400 = vadd.s32 %v395, %v391
        %v401 = vadd.s32 %v395, %v392
        %v402 = vadd.s32 %v395, %v393
        %v403 = vadd.s32 %v395, %v394
        %vm404 = vcmp.lt.s32.totalorder %v396, 200
        %vm405 = vcmp.lt.s32.totalorder %v397, 200
        %vm406 = vcmp.lt.s32.totalorder %v398, 200
        %vm407 = vcmp.lt.s32.totalorder %v399, 200
        %vm408 = vcmp.lt.s32.totalorder %v400, 200
        %vm409 = vcmp.lt.s32.totalorder %v401, 200
        %vm410 = vcmp.lt.s32.totalorder %v402, 200
        %vm411 = vcmp.lt.s32.totalorder %v403, 200
        %v412 = vsel %vm404, %v377, 0.0
        %v413 = vsel %vm405, %v378, 0.0
        %v414 = vsel %vm406, %v379, 0.0
        %v415 = vsel %vm407, %v380, 0.0
        %v416 = vsel %vm408, %v381, 0.0
        %v417 = vsel %vm409, %v382, 0.0
        %v418 = vsel %vm410, %v383, 0.0
        %v419 = vsel %vm411, %v384, 0.0
        %vm420 = vcmask 7168
        %v421 = vsel %vm420, %v412, 0.0
        %v422 = vsel %vm420, %v413, 0.0
        %v423 = vadd.f32 %v421, %v422
        %v424 = vsel %vm420, %v414, 0.0
        %v425 = vadd.f32 %v423, %v424
        %v426 = vsel %vm420, %v415, 0.0
        %v427 = vadd.f32 %v425, %v426
        %v428 = vsel %vm420, %v416, 0.0
        %v429 = vadd.f32 %v427, %v428
        %v430 = vsel %vm420, %v417, 0.0
        %v431 = vadd.f32 %v429, %v430
        %v432 = vsel %vm420, %v418, 0.0
        %v433 = vadd.f32 %v431, %v432
        %v434 = vsel %vm420, %v419, 0.0
        %v435 = vadd.f32 %v433, %v434
        %436 = vadd.xlane.f32.xlu0 %v435
        %v437 = vpop.xlane.xlu0 %436
        %v438 = vrot.slane %v437, 4
        %v439 = vadd.f32 %v437, %v438
        %v440 = vrot.slane %v439, 2
        %v441 = vadd.f32 %v439, %v440
        %v442 = vrot.slane %v441, 1
        %v443 = vadd.f32 %v441, %v442
        %s444 = vtos %v443
        %v445 = vstv %s444
        %446 = vst [vmem:[%s200] sm:$0x1] %v445
        %s447 = sand.u32 %s82, 1
        %s448 = scalar_lea.sflag [#allocation4], %s447
        %s449 = sand.u32 %s82, 1
        %s450 = scalar_lea.vmem [#allocation7], %s449
        // Predicated region
        $region37: #{tpu_custom_call.1} parent=27 // pred_check
          %p451 = pneg %p92
        $region38: #{tpu_custom_call.1} parent=27 // pred_check_branch
          %453 = sbr.rel (%p451) target = $region40
        $region39: #{tpu_custom_call.1} parent=27 // pred_region
          %s455 = ssub.s32 16, 16
          %456 = vsyncadd %s448, %s455
          %s457 = smul.addr %s22, 16
          %s458 = scalar_lea.hbm %s2, %s457
          %s460 = sshll.u32 %s450, 4
          %s461 = int_to_ptr.vmem [resolvable:$true] %s460
          %463 = dma.vmem_to_hbm [thread:$0]  %s461, 16, %s458, %s448
        $region40: #{tpu_custom_call.1} parent=27 // pred_fallthru
          _
      $region28: #{tpu_custom_call.1} parent=5 // pred_fallthru
        _
      %p464 = scmp.le.s32.totalorder 2, %s17
      // Predicated region
      $region41: #{tpu_custom_call.1} parent=5 // pred_check
        %p465 = pneg %p464
      $region42: #{tpu_custom_call.1} parent=5 // pred_check_branch
        %467 = sbr.rel (%p465) target = $region44
      $region43: #{tpu_custom_call.1} parent=5 // pred_region
        %s468 = ssub.s32 %s17, 2
        // Predicated region
        $region45: #{tpu_custom_call.1} parent=43 // pred_check
          %p469 = pneg %p98
        $region46: #{tpu_custom_call.1} parent=43 // pred_check_branch
          %471 = sbr.rel (%p469) target = $region48
        $region47: #{tpu_custom_call.1} parent=43 // pred_region
          %s472 = sand.u32 %s83, 1
          %s473 = scalar_lea.sflag [#allocation4], %s472
          %s474 = sand.u32 %s83, 1
          %s475 = scalar_lea.vmem [#allocation7], %s474
          %476 = dma.done %s473, 16
        $region48: #{tpu_custom_call.1} parent=43 // pred_fallthru
          _
      $region44: #{tpu_custom_call.1} parent=5 // pred_fallthru
        _
    $region6: #{tpu_custom_call.1} parent=1 // loop_footer
      %s21 = sadd.s32 1, %s17
    $region7: #{tpu_custom_call.1} parent=1 // loop_footer_branch
      %16 = sbr.rel target = $region3
    $region8: #{tpu_custom_call.1} parent=1 // loop_exit
      _
    %477 = vsyncpa [#allocation3], 1
    %s478 = scalar_lea.sflag [#allocation3], 1
    %479 = vsyncpa %s478, 1
    %480 = vsyncpa [#allocation6], 1
    %s481 = scalar_lea.sflag [#allocation6], 1
    %482 = vsyncpa %s481, 1
    %483 = vsyncpa [#allocation4], 1
    %s484 = scalar_lea.sflag [#allocation4], 1
    %485 = vsyncpa %s484, 1

</llo_original>
